<compile_context>
chip_gen: v7x
topology: tpu7x:2x2x1
jax: 0.10.0
libtpu: 0.0.40
codegen_flags: <defaults>
</compile_context>

<pallas_src>
import functools

import jax
import jax.numpy as jnp
from jax.experimental import pallas as pl
from jax.experimental.pallas import tpu as pltpu

LANES = 128
NUM_CORES = 2          # megacore split on v7x; harmless (sequential) on v5e/v6e
MAX_BLOCK_ROWS = 4096  # (4096, 128) f32 = 2 MiB per input tile


def _round_up(x, m):
    return ((x + m - 1) // m) * m


def _bce_blur_kernel(pred_ref, true_ref, o_ref, *, inv_alpha):
    i = pl.program_id(1)

    # o_ref is the per-core (8, 128) partial-sum accumulator (resident across
    # the "arbitrary" reduction axis).
    @pl.when(i == 0)
    def _():
        o_ref[...] = jnp.zeros_like(o_ref)

    x = pred_ref[...].astype(jnp.float32)
    z = true_ref[...].astype(jnp.float32)

    # Shared EUP work: e = exp(-|x|) feeds both the stable-BCE term and sigmoid.
    e = jnp.exp(-jnp.abs(x))

    # Numerically-stable BCEWithLogitsLoss (reduction='none'):
    #   l = max(x, 0) - x*z + log(1 + exp(-|x|))
    loss = jnp.maximum(x, 0.0) - x * z + jnp.log1p(e)

    # sigmoid(x) = where(x>=0, 1, e) / (1 + e), reusing e (saves one EUP exp).
    p = jnp.where(x >= 0.0, 1.0, e) * pl.reciprocal(1.0 + e, approx=True)
    dx = p - z
    alpha_factor = 1.0 - jnp.exp((dx - 1.0) * inv_alpha)
    loss = loss * alpha_factor

    # Per-lane/sublane partial sums stay on the VPU (elementwise adds of vregs);
    # the single cross-lane reduction is deferred to the wrapper.
    rows = loss.shape[0]
    o_ref[...] += loss.reshape(rows // 8, 8, LANES).sum(axis=0)


def bce_blur_with_logits_loss(pred, true, alpha=0.05):
    """Returns scalar mean( BCEWithLogits(pred, true) * blur_factor )."""
    assert pred.shape == true.shape
    n_total = int(pred.size)

    # Keep the input dtype in HBM (no wrapper-side f32 cast); cast in-kernel.
    pred_flat = pred.reshape(-1)
    true_flat = true.reshape(-1)

    rows_min = pl.cdiv(n_total, LANES)
    # Block rows: multiple of 16 (covers f32 (8,128) and bf16 (16,128) tiling),
    # capped so 2 inputs x 2 buffers stays well under every chip's scoped VMEM.
    block_rows = min(MAX_BLOCK_ROWS,
                     _round_up(max(pl.cdiv(rows_min, NUM_CORES), 1), 16))
    padded_rows = _round_up(rows_min, NUM_CORES * block_rows)
    inner_grid = padded_rows // (NUM_CORES * block_rows)

    pad = padded_rows * LANES - n_total
    if pad > 0:
        # pred=+30, true=1  =>  padded loss ~ 1e-13 * alpha_factor(~1) each:
        # negligible, so the kernel needs no padding mask at all.
        pred_flat = jnp.pad(pred_flat, (0, pad), constant_values=30.0)
        true_flat = jnp.pad(true_flat, (0, pad), constant_values=1.0)

    pred2d = pred_flat.reshape(padded_rows, LANES)
    true2d = true_flat.reshape(padded_rows, LANES)

    kernel = functools.partial(_bce_blur_kernel,
                               inv_alpha=1.0 / (float(alpha) + 0.0001))

    n_padded = padded_rows * LANES
    cost = pl.CostEstimate(
        flops=12 * n_padded,
        transcendentals=3 * n_padded,
        bytes_accessed=int(pred2d.size) * pred2d.dtype.itemsize
                       + int(true2d.size) * true2d.dtype.itemsize
                       + NUM_CORES * 8 * LANES * 4,
    )

    out = pl.pallas_call(
        kernel,
        out_shape=jax.ShapeDtypeStruct((NUM_CORES * 8, LANES), jnp.float32),
        grid_spec=pltpu.PrefetchScalarGridSpec(
            num_scalar_prefetch=0,
            grid=(NUM_CORES, inner_grid),
            in_specs=[
                pl.BlockSpec((block_rows, LANES),
                             lambda c, i: (c * inner_grid + i, 0)),
                pl.BlockSpec((block_rows, LANES),
                             lambda c, i: (c * inner_grid + i, 0)),
            ],
            out_specs=pl.BlockSpec((8, LANES), lambda c, i: (c, 0)),
        ),
        compiler_params=pltpu.CompilerParams(
            dimension_semantics=("parallel", "arbitrary"),
        ),
        cost_estimate=cost,
    )(pred2d, true2d)

    # Final cross-lane reduce over a tiny (16, 128) array + mean over the
    # ORIGINAL element count.
    return jnp.sum(out) / jnp.float32(n_total)


def _reference(pred, true, alpha=0.05):
    x = pred.astype(jnp.float32)
    z = true.astype(jnp.float32)
    loss = jnp.maximum(x, 0.0) - x * z + jnp.log1p(jnp.exp(-jnp.abs(x)))
    p = jax.nn.sigmoid(x)
    dx = p - z
    loss = loss * (1.0 - jnp.exp((dx - 1.0) / (alpha + 0.0001)))
    return jnp.mean(loss)


if __name__ == "__main__":
    key = jax.random.PRNGKey(0)
    k1, k2 = jax.random.split(key)
    # NCHW-shaped logits/targets, as a detection head would produce.
    shape = (2, 4, 16, 16)
    pred = jax.random.normal(k1, shape, dtype=jnp.float32)
    true = (jax.random.uniform(k2, shape) > 0.5).astype(jnp.float32)

    out = bce_blur_with_logits_loss(pred, true, alpha=0.05)
    out = jax.block_until_ready(out)

    ref = _reference(pred, true, alpha=0.05)
    # Tolerance loosened slightly vs exact math because the kernel uses the
    # EUP approximate reciprocal for sigmoid's denominator.
    assert jnp.allclose(out, ref, rtol=1e-3, atol=1e-6), (out, ref)
    print("KERNEL_OK")
</pallas_src>

<mosaic_0001>
module attributes {stable_mosaic.version = 11 : i64} {
  func.func @_bce_blur_kernel(%arg0: i32, %arg1: i32, %arg2: memref<16x128xf32, #tpu.memory_space<vmem>>, %arg3: memref<16x128xf32, #tpu.memory_space<vmem>>, %arg4: memref<8x128xf32, #tpu.memory_space<vmem>>) attributes {dimension_semantics = [#tpu.dimension_semantics<parallel>, #tpu.dimension_semantics<arbitrary>], iteration_bounds = array<i64: 2, 1>, scalar_prefetch = 0 : i64, scratch_operands = 0 : i64, tpu.core_type = #tpu.core_type<tc>, window_params = [{transform_indices = @transform_0, window_bounds = array<i64: 16, 128>}, {transform_indices = @transform_1, window_bounds = array<i64: 16, 128>}, {transform_indices = @transform_2, window_bounds = array<i64: 8, 128>}]} {
    %c0_i32 = arith.constant 0 : i32
    %0 = arith.cmpi eq, %arg1, %c0_i32 : i32
    %1 = arith.extui %0 : i1 to i32
    %c0_i32_0 = arith.constant 0 : i32
    %2 = arith.cmpi ne, %1, %c0_i32_0 : i32
    scf.if %2 {
      %cst_16 = arith.constant 0.000000e+00 : f32
      %37 = vector.broadcast %cst_16 : f32 to vector<8x128xf32>
      %c0_17 = arith.constant 0 : index
      %c0_18 = arith.constant 0 : index
      %38 = vector.load %arg4[%c0_17, %c0_18] : memref<8x128xf32, #tpu.memory_space<vmem>>, vector<8x128xf32>
      tpu.vector_store %arg4[%c0_17, %c0_18], %37 {strides = array<i32>} : memref<8x128xf32, #tpu.memory_space<vmem>>, vector<8x128xf32>,
    } else {
    }
    %c0 = arith.constant 0 : index
    %c0_1 = arith.constant 0 : index
    %3 = vector.load %arg2[%c0, %c0_1] : memref<16x128xf32, #tpu.memory_space<vmem>>, vector<16x128xf32>
    %c0_2 = arith.constant 0 : index
    %c0_3 = arith.constant 0 : index
    %4 = vector.load %arg3[%c0_2, %c0_3] : memref<16x128xf32, #tpu.memory_space<vmem>>, vector<16x128xf32>
    %5 = math.absf %3 : vector<16x128xf32>
    %cst = arith.constant 0.000000e+00 : f32
    %6 = vector.broadcast %cst : f32 to vector<16x128xf32>
    %7 = arith.subf %6, %5 : vector<16x128xf32>
    %8 = math.exp %7 : vector<16x128xf32>
    %cst_4 = arith.constant 0.000000e+00 : f32
    %9 = vector.broadcast %cst_4 : f32 to vector<16x128xf32>
    %10 = arith.maximumf %3, %9 : vector<16x128xf32>
    %11 = arith.mulf %3, %4 : vector<16x128xf32>
    %12 = arith.subf %10, %11 : vector<16x128xf32>
    %13 = math.log1p %8 : vector<16x128xf32>
    %14 = arith.addf %12, %13 : vector<16x128xf32>
    %cst_5 = arith.constant 0.000000e+00 : f32
    %15 = vector.broadcast %cst_5 : f32 to vector<16x128xf32>
    %16 = arith.cmpf oge, %3, %15 : vector<16x128xf32>
    %cst_6 = arith.constant 1.000000e+00 : f32
    %17 = vector.broadcast %cst_6 : f32 to vector<16x128xf32>
    %18 = arith.select %16, %17, %8 : vector<16x128xi1>, vector<16x128xf32>
    %cst_7 = arith.constant 1.000000e+00 : f32
    %19 = vector.broadcast %cst_7 : f32 to vector<16x128xf32>
    %20 = arith.addf %19, %8 : vector<16x128xf32>
    %21 = tpu.reciprocal %20 {approx = true} : vector<16x128xf32> -> vector<16x128xf32>
    %22 = arith.mulf %18, %21 : vector<16x128xf32>
    %23 = arith.subf %22, %4 : vector<16x128xf32>
    %cst_8 = arith.constant 1.000000e+00 : f32
    %24 = vector.broadcast %cst_8 : f32 to vector<16x128xf32>
    %25 = arith.subf %23, %24 : vector<16x128xf32>
    %cst_9 = arith.constant 19.9600792 : f32
    %26 = vector.broadcast %cst_9 : f32 to vector<16x128xf32>
    %27 = arith.mulf %25, %26 : vector<16x128xf32>
    %28 = math.exp %27 : vector<16x128xf32>
    %cst_10 = arith.constant 1.000000e+00 : f32
    %29 = vector.broadcast %cst_10 : f32 to vector<16x128xf32>
    %30 = arith.subf %29, %28 : vector<16x128xf32>
    %31 = arith.mulf %14, %30 : vector<16x128xf32>
    %c0_11 = arith.constant 0 : index
    %c0_12 = arith.constant 0 : index
    %32 = vector.load %arg4[%c0_11, %c0_12] : memref<8x128xf32, #tpu.memory_space<vmem>>, vector<8x128xf32>
    %33 = vector.shape_cast %31 : vector<16x128xf32> to vector<2x8x128xf32>
    %cst_13 = arith.constant dense<0.000000e+00> : vector<8x128xf32>
    %34 = vector.multi_reduction <add>, %33, %cst_13 [0] : vector<2x8x128xf32> to vector<8x128xf32>
    %35 = arith.addf %32, %34 : vector<8x128xf32>
    %c0_14 = arith.constant 0 : index
    %c0_15 = arith.constant 0 : index
    %36 = vector.load %arg4[%c0_14, %c0_15] : memref<8x128xf32, #tpu.memory_space<vmem>>, vector<8x128xf32>
    tpu.vector_store %arg4[%c0_14, %c0_15], %35 {strides = array<i32>} : memref<8x128xf32, #tpu.memory_space<vmem>>, vector<8x128xf32>,
    return
  }
  func.func @transform_0(%arg0: i32, %arg1: i32) -> (i32, i32) {
    %c1_i32 = arith.constant 1 : i32
    %0 = arith.muli %arg0, %c1_i32 : i32
    %1 = arith.addi %0, %arg1 : i32
    %c0_i32 = arith.constant 0 : i32
    %c0_i32_0 = arith.constant 0 : i32
    return %1, %c0_i32 : i32, i32
  }
  func.func @transform_1(%arg0: i32, %arg1: i32) -> (i32, i32) {
    %c1_i32 = arith.constant 1 : i32
    %0 = arith.muli %arg0, %c1_i32 : i32
    %1 = arith.addi %0, %arg1 : i32
    %c0_i32 = arith.constant 0 : i32
    %c0_i32_0 = arith.constant 0 : i32
    return %1, %c0_i32 : i32, i32
  }
  func.func @transform_2(%arg0: i32, %arg1: i32) -> (i32, i32) {
    %c0_i32 = arith.constant 0 : i32
    %c0_i32_0 = arith.constant 0 : i32
    return %arg0, %c0_i32 : i32, i32
  }
}

</mosaic_0001>

<llo_original>
// kernel: tpu_custom_call.1
$region0: #{tpu_custom_call.1}
  #allocation0 [shape = 'u32[]', space=smem, size = 0x4, offset = 0x4, fixed_abs, tag = 'smem constant byte address 0x4 - core index']
  #allocation1 [shape = 'u32[144,128]{1,0:T(1,128)}', space=vmem, size = 0x12000, scoped, tag = 'internal scratch']
  %s0 = inlined_call_operand.hbm [shape: f32[32,128], index: 0, kind: input, shape index: {}]
  %s1 = inlined_call_operand.hbm [shape: f32[32,128], index: 1, kind: input, shape index: {}]
  %s2 = inlined_call_operand.hbm [shape: f32[16,128], index: 2, kind: output, shape index: {}]
  %s3 = sld [smem:[#allocation0]]
  $region53: #{tpu_custom_call.1} parent=0
    _
  %s5 = ssub.s32 1, %s3
  %s6 = scalar_select 0, %s5, %s3
  $region1: #{tpu_custom_call.1} parent=0
    #allocation2 [shape = 'u8[16384]{0}', space=vmem, size = 0x4000, scoped, tag = 'input window, operand 0']
    #allocation3 [shape = 's32[2]{0}', space=sflag, size = 0x8, scoped, tag = 'scoped memory for tpu_custom_call.1']
    #allocation4 [shape = 's32[2]{0}', space=sflag, size = 0x8, scoped, tag = 'scoped memory for tpu_custom_call.1']
    #allocation5 [shape = 'u8[16384]{0}', space=vmem, size = 0x4000, scoped, tag = 'input window, operand 1']
    #allocation6 [shape = 's32[2]{0}', space=sflag, size = 0x8, scoped, tag = 'scoped memory for tpu_custom_call.1']
    #allocation7 [shape = 'u8[8192]{0}', space=vmem, size = 0x2000, scoped, tag = 'output window, operand 0']
    %7 = vsyncpa [#allocation3], 0
    %s8 = scalar_lea.sflag [#allocation3], 1
    %9 = vsyncpa %s8, 0
    %10 = vsyncpa [#allocation6], 0
    %s11 = scalar_lea.sflag [#allocation6], 1
    %12 = vsyncpa %s11, 0
    %13 = vsyncpa [#allocation4], 0
    %s14 = scalar_lea.sflag [#allocation4], 1
    %15 = vsyncpa %s14, 0
    loop: start=0, step=1, limit=4
    $region2: #{tpu_custom_call.1} parent=1 // loop_pre_header
      _
    $region3: #{tpu_custom_call.1} parent=1 // loop_header
      %s17 = sphi 0, %s21
      %p18 = scmp.ge.s32.totalorder %s17, 4
      %s24 = sphi 0, %s36
      %s25 = sphi 0, %s32
      %s26 = sphi 0, %s24
      %s27 = sphi 0, %s25
      %s28 = sphi 0, %s26
      %s29 = sphi 0, %s27
      %s41 = sphi 0, %s43
      %s44 = sphi 0, %s41
      %s45 = sphi 0, %s44
      %s61 = sphi 0, %s45
      %s69 = sphi 0, %s71
      %s72 = sphi 0, %s69
      %s73 = sphi 0, %s72
      %s89 = sphi 0, %s73
      %s95 = sphi 0, %s97
      %s98 = sphi 0, %s95
      %s99 = sphi 0, %s98
      %s115 = sphi 0, %s99
    $region4: #{tpu_custom_call.1} parent=1 // loop_header_branch
      %20 = sbr.rel (%p18) target = $region8
    $region5: #{tpu_custom_call.1} parent=1 // loop_body
      %s22 = ssub.s32 %s17, 1
      %s23 = ssub.s32 %s17, 2
      %s30 = sadd.s32 1, %s25
      %p31 = scmp.ge.s32.totalorder %s30, 1
      %s32 = scalar_select %p31, 0, %s30
      %s33 = sadd.s32 1, %s24
      %s34 = scalar_select %p31, %s33, %s24
      %p35 = scmp.ge.s32.totalorder %s34, 2
      %s36 = scalar_select %p35, 0, %s34
      %s37 = sadd.s32 %s24, %s25
      %s38 = sadd.s32 %s36, %s32
      %s39 = ssub.s32 %s37, %s38
      %p40 = scmp.eq.s32.totalorder %s39, 0
      %s42 = sadd.s32 %s41, 1
      %s43 = scalar_select %p40, %s41, %s42
      %p46 = pneg %p40
      %p47 = scmp.eq.s32.totalorder %s17, 1
      %p48 = por %p46, %p47
      %p49 = scmp.ne.s32.totalorder %s41, %s44
      %p50 = scmp.eq.s32.totalorder %s17, 0
      %p51 = por %p49, %p50
      %p52 = scmp.ne.s32.totalorder %s41, %s44
      %p53 = scmp.eq.s32.totalorder %s22, 1
      %p54 = por %p52, %p53
      %p55 = scmp.ne.s32.totalorder %s44, %s45
      %p56 = scmp.eq.s32.totalorder %s22, 0
      %p57 = por %p55, %p56
      %p58 = scmp.ne.s32.totalorder %s44, %s45
      %p59 = scmp.eq.s32.totalorder %s23, 1
      %p60 = por %p58, %p59
      %p62 = scmp.ne.s32.totalorder %s45, %s61
      %p63 = scmp.eq.s32.totalorder %s23, 0
      %p64 = por %p62, %p63
      %s65 = sadd.s32 %s24, %s25
      %s66 = sadd.s32 %s36, %s32
      %s67 = ssub.s32 %s65, %s66
      %p68 = scmp.eq.s32.totalorder %s67, 0
      %s70 = sadd.s32 %s69, 1
      %s71 = scalar_select %p68, %s69, %s70
      %p74 = pneg %p68
      %p75 = scmp.eq.s32.totalorder %s17, 1
      %p76 = por %p74, %p75
      %p77 = scmp.ne.s32.totalorder %s69, %s72
      %p78 = scmp.eq.s32.totalorder %s17, 0
      %p79 = por %p77, %p78
      %p80 = scmp.ne.s32.totalorder %s69, %s72
      %p81 = scmp.eq.s32.totalorder %s22, 1
      %p82 = por %p80, %p81
      %p83 = scmp.ne.s32.totalorder %s72, %s73
      %p84 = scmp.eq.s32.totalorder %s22, 0
      %p85 = por %p83, %p84
      %p86 = scmp.ne.s32.totalorder %s72, %s73
      %p87 = scmp.eq.s32.totalorder %s23, 1
      %p88 = por %p86, %p87
      %p90 = scmp.ne.s32.totalorder %s73, %s89
      %p91 = scmp.eq.s32.totalorder %s23, 0
      %p92 = por %p90, %p91
      %s93 = ssub.s32 %s24, %s36
      %p94 = scmp.eq.s32.totalorder %s93, 0
      %s96 = sadd.s32 %s95, 1
      %s97 = scalar_select %p94, %s95, %s96
      %p100 = pneg %p94
      %p101 = scmp.eq.s32.totalorder %s17, 1
      %p102 = por %p100, %p101
      %p103 = scmp.ne.s32.totalorder %s95, %s98
      %p104 = scmp.eq.s32.totalorder %s17, 0
      %p105 = por %p103, %p104
      %p106 = scmp.ne.s32.totalorder %s95, %s98
      %p107 = scmp.eq.s32.totalorder %s22, 1
      %p108 = por %p106, %p107
      %p109 = scmp.ne.s32.totalorder %s98, %s99
      %p110 = scmp.eq.s32.totalorder %s22, 0
      %p111 = por %p109, %p110
      %p112 = scmp.ne.s32.totalorder %s98, %s99
      %p113 = scmp.eq.s32.totalorder %s23, 1
      %p114 = por %p112, %p113
      %p116 = scmp.ne.s32.totalorder %s99, %s115
      %p117 = scmp.eq.s32.totalorder %s23, 0
      %p118 = por %p116, %p117
      %p119 = scmp.le.s32.totalorder 1, %s17
      %p120 = scmp.lt.s32.totalorder %s17, 3
      %p121 = pnand %p119, %p120
      %p122 = pneg %p121
      // Predicated region
      $region9: #{tpu_custom_call.1} parent=5 // pred_check
        _
      $region10: #{tpu_custom_call.1} parent=5 // pred_check_branch
        %124 = sbr.rel (%p121) target = $region12
      $region11: #{tpu_custom_call.1} parent=5 // pred_region
        %s125 = ssub.s32 %s17, 1
      $region12: #{tpu_custom_call.1} parent=5 // pred_fallthru
        _
      %p126 = scmp.lt.s32.totalorder %s17, 2
      // Predicated region
      $region13: #{tpu_custom_call.1} parent=5 // pred_check
        %p127 = pneg %p126
      $region14: #{tpu_custom_call.1} parent=5 // pred_check_branch
        %129 = sbr.rel (%p127) target = $region16
      $region15: #{tpu_custom_call.1} parent=5 // pred_region
        // Predicated region
        $region17: #{tpu_custom_call.1} parent=15 // pred_check
          %p130 = pneg %p51
        $region18: #{tpu_custom_call.1} parent=15 // pred_check_branch
          %132 = sbr.rel (%p130) target = $region20
        $region19: #{tpu_custom_call.1} parent=15 // pred_region
          %s133 = sand.u32 %s41, 1
          %s134 = scalar_lea.sflag [#allocation3], %s133
          %s135 = sand.u32 %s41, 1
          %s136 = smul.addr %s135, 16
          %s137 = scalar_lea.vmem [#allocation2], %s136
          %s138 = sadd.s32 %s24, %s25
          %s139 = smul.u32 2, %s138
          %s141 = ssub.s32 256, 256
          %142 = vsyncadd %s134, %s141
          %s143 = smul.addr %s139, 128
          %s144 = scalar_lea.hbm %s0, %s143
          %s145 = sshll.u32 %s137, 4
          %s146 = int_to_ptr.vmem [resolvable:$true] %s145
          %151 = dma.hbm_to_vmem [thread:$0]  %s144, 256, %s146, %s134, 128, 128, 8
        $region20: #{tpu_custom_call.1} parent=15 // pred_fallthru
          _
        // Predicated region
        $region21: #{tpu_custom_call.1} parent=15 // pred_check
          %p152 = pneg %p79
        $region22: #{tpu_custom_call.1} parent=15 // pred_check_branch
          %154 = sbr.rel (%p152) target = $region24
        $region23: #{tpu_custom_call.1} parent=15 // pred_region
          %s155 = sand.u32 %s69, 1
          %s156 = scalar_lea.sflag [#allocation6], %s155
          %s157 = sand.u32 %s69, 1
          %s158 = smul.addr %s157, 16
          %s159 = scalar_lea.vmem [#allocation5], %s158
          %s160 = sadd.s32 %s24, %s25
          %s161 = smul.u32 2, %s160
          %s163 = ssub.s32 256, 256
          %164 = vsyncadd %s156, %s163
          %s165 = smul.addr %s161, 128
          %s166 = scalar_lea.hbm %s1, %s165
          %s167 = sshll.u32 %s159, 4
          %s168 = int_to_ptr.vmem [resolvable:$true] %s167
          %173 = dma.hbm_to_vmem [thread:$0]  %s166, 256, %s168, %s156, 128, 128, 8
        $region24: #{tpu_custom_call.1} parent=15 // pred_fallthru
          _
      $region16: #{tpu_custom_call.1} parent=5 // pred_fallthru
        _
      %p174 = scmp.le.s32.totalorder 1, %s17
      %p175 = scmp.lt.s32.totalorder %s17, 3
      %p176 = pnand %p174, %p175
      %p177 = pneg %p176
      // Predicated region
      $region25: #{tpu_custom_call.1} parent=5 // pred_check
        _
      $region26: #{tpu_custom_call.1} parent=5 // pred_check_branch
        %179 = sbr.rel (%p176) target = $region28
      $region27: #{tpu_custom_call.1} parent=5 // pred_region
        %s180 = ssub.s32 %s17, 1
        %s181 = sand.u32 %s44, 1
        %s182 = scalar_lea.sflag [#allocation3], %s181
        %s183 = sand.u32 %s44, 1
        %s184 = smul.addr %s183, 16
        %s185 = scalar_lea.vmem [#allocation2], %s184
        // Predicated region
        $region29: #{tpu_custom_call.1} parent=27 // pred_check
          %p186 = pneg %p57
        $region30: #{tpu_custom_call.1} parent=27 // pred_check_branch
          %188 = sbr.rel (%p186) target = $region32
        $region31: #{tpu_custom_call.1} parent=27 // pred_region
          %189 = dma.done %s182, 256
        $region32: #{tpu_custom_call.1} parent=27 // pred_fallthru
          _
        %s190 = sand.u32 %s72, 1
        %s191 = scalar_lea.sflag [#allocation6], %s190
        %s192 = sand.u32 %s72, 1
        %s193 = smul.addr %s192, 16
        %s194 = scalar_lea.vmem [#allocation5], %s193
        // Predicated region
        $region33: #{tpu_custom_call.1} parent=27 // pred_check
          %p195 = pneg %p85
        $region34: #{tpu_custom_call.1} parent=27 // pred_check_branch
          %197 = sbr.rel (%p195) target = $region36
        $region35: #{tpu_custom_call.1} parent=27 // pred_region
          %198 = dma.done %s191, 256
        $region36: #{tpu_custom_call.1} parent=27 // pred_fallthru
          _
        %s199 = sand.u32 %s44, 1
        %s200 = scalar_lea.sflag [#allocation3], %s199
        %s201 = sand.u32 %s44, 1
        %s202 = smul.addr %s201, 16
        %s203 = scalar_lea.vmem [#allocation2], %s202
        %p204 = pneg %p57
        %p205 = pneg %p54
        %s206 = sand.u32 %s72, 1
        %s207 = scalar_lea.sflag [#allocation6], %s206
        %s208 = sand.u32 %s72, 1
        %s209 = smul.addr %s208, 16
        %s210 = scalar_lea.vmem [#allocation5], %s209
        %p211 = pneg %p85
        %p212 = pneg %p82
        %p213 = pneg %p111
        %p214 = pneg %p108
        %s215 = sand.u32 %s98, 1
        %s216 = scalar_lea.sflag [#allocation4], %s215
        %s217 = sand.u32 %s98, 1
        %s218 = smul.addr %s217, 8
        %s219 = scalar_lea.vmem [#allocation7], %s218
        %s220 = sadd.s32 %s26, %s27
        %s221 = smul.u32 2, %s220
        %s222 = sadd.s32 %s26, %s27
        %s223 = smul.u32 2, %s222
        %p224 = scmp.eq.s32.totalorder %s27, 0
        // Predicated region
        $region37: #{tpu_custom_call.1} parent=27 // pred_check
          %p225 = pneg %p224
        $region38: #{tpu_custom_call.1} parent=27 // pred_check_branch
          %227 = sbr.rel (%p225) target = $region40
        $region39: #{tpu_custom_call.1} parent=27 // pred_region
          %228 = vst [vmem:[%s219] sm:$0xff] 0.0
        $region40: #{tpu_custom_call.1} parent=27 // pred_fallthru
          _
        %v229 = vld [vmem:[%s185] sm:$0xff]
        %v230 = vld [vmem:[%s185 + $0x8] sm:$0xff]
        %v231 = vld [vmem:[%s194] sm:$0xff]
        %v232 = vld [vmem:[%s194 + $0x8] sm:$0xff]
        %v233 = vand.u32 2147483647, %v229
        %v234 = vand.u32 2147483647, %v230
        %v235 = vsub.f32 0.0, %v233
        %v236 = vsub.f32 0.0, %v234
        %v237 = vmul.f32 %v235, 1.442695
        %v238 = vpow.pop %v237
        %v239 = vmul.f32 %v236, 1.442695
        %v240 = vpow.pop %v239
        %v241 = vmax.f32 %v229, 0.0
        %v242 = vmax.f32 %v230, 0.0
        %v243 = vmul.f32 %v229, %v231
        %v244 = vmul.f32 %v230, %v232
        %v245 = vsub.f32 %v241, %v243
        %v246 = vsub.f32 %v242, %v244
        %v247 = vadd.f32 %v238, 1.0
        %v248 = vlog2.pop %v247
        %v249 = vmul.f32 %v248, 0.6931472
        %v250 = vmul.f32 -0.5, %v238
        %v251 = vadd.f32 %v250, 1.0
        %v252 = vmul.f32 %v251, %v238
        %v253 = vand.u32 2147483647, %v238
        %vm254 = vcmp.lt.f32.partialorder %v253, 0.0004427343
        %v255 = vsel %vm254, %v252, %v249
        %v256 = vadd.f32 %v240, 1.0
        %v257 = vlog2.pop %v256
        %v258 = vmul.f32 %v257, 0.6931472
        %v259 = vmul.f32 -0.5, %v240
        %v260 = vadd.f32 %v259, 1.0
        %v261 = vmul.f32 %v260, %v240
        %v262 = vand.u32 2147483647, %v240
        %vm263 = vcmp.lt.f32.partialorder %v262, 0.0004427343
        %v264 = vsel %vm263, %v261, %v258
        %v265 = vadd.f32 %v245, %v255
        %v266 = vadd.f32 %v246, %v264
        %vm267 = vcmp.ge.f32.partialorder %v229, 0.0
        %vm268 = vcmp.ge.f32.partialorder %v230, 0.0
        %v269 = vsel %vm267, 1.0, %v238
        %v270 = vsel %vm268, 1.0, %v240
        %v271 = vadd.f32 %v238, 1.0
        %v272 = vadd.f32 %v240, 1.0
        %v273 = vrcp.pop %v271
        %v274 = vrcp.pop %v272
        %v275 = vmul.f32 %v269, %v273
        %v276 = vmul.f32 %v270, %v274
        %v277 = vsub.f32 %v275, %v231
        %v278 = vsub.f32 %v276, %v232
        %v279 = vsub.f32 %v277, 1.0
        %v280 = vsub.f32 %v278, 1.0
        %v281 = vmul.f32 %v279, 19.96008
        %v282 = vmul.f32 %v280, 19.96008
        %v283 = vmul.f32 %v281, 1.442695
        %v284 = vpow.pop %v283
        %v285 = vmul.f32 %v282, 1.442695
        %v286 = vpow.pop %v285
        %v287 = vsub.f32 1.0, %v284
        %v288 = vsub.f32 1.0, %v286
        %v289 = vmul.f32 %v265, %v287
        %v290 = vmul.f32 %v266, %v288
        %v291 = vld [vmem:[%s219] sm:$0xff]
        %v292 = vadd.f32 %v289, %v290
        %v293 = vadd.f32 %v291, %v292
        %294 = vst [vmem:[%s219] sm:$0xff] %v293
        %s295 = sand.u32 %s98, 1
        %s296 = scalar_lea.sflag [#allocation4], %s295
        %s297 = sand.u32 %s98, 1
        %s298 = smul.addr %s297, 8
        %s299 = scalar_lea.vmem [#allocation7], %s298
        // Predicated region
        $region41: #{tpu_custom_call.1} parent=27 // pred_check
          %p300 = pneg %p108
        $region42: #{tpu_custom_call.1} parent=27 // pred_check_branch
          %302 = sbr.rel (%p300) target = $region44
        $region43: #{tpu_custom_call.1} parent=27 // pred_region
          %s304 = ssub.s32 128, 128
          %305 = vsyncadd %s296, %s304
          %s306 = smul.addr %s26, 128
          %s307 = scalar_lea.hbm %s2, %s306
          %s309 = sshll.u32 %s299, 4
          %s310 = int_to_ptr.vmem [resolvable:$true] %s309
          %312 = dma.vmem_to_hbm [thread:$0]  %s310, 128, %s307, %s296
        $region44: #{tpu_custom_call.1} parent=27 // pred_fallthru
          _
      $region28: #{tpu_custom_call.1} parent=5 // pred_fallthru
        _
      %p313 = scmp.le.s32.totalorder 2, %s17
      // Predicated region
      $region45: #{tpu_custom_call.1} parent=5 // pred_check
        %p314 = pneg %p313
      $region46: #{tpu_custom_call.1} parent=5 // pred_check_branch
        %316 = sbr.rel (%p314) target = $region48
      $region47: #{tpu_custom_call.1} parent=5 // pred_region
        %s317 = ssub.s32 %s17, 2
        // Predicated region
        $region49: #{tpu_custom_call.1} parent=47 // pred_check
          %p318 = pneg %p114
        $region50: #{tpu_custom_call.1} parent=47 // pred_check_branch
          %320 = sbr.rel (%p318) target = $region52
        $region51: #{tpu_custom_call.1} parent=47 // pred_region
          %s321 = sand.u32 %s99, 1
          %s322 = scalar_lea.sflag [#allocation4], %s321
          %s323 = sand.u32 %s99, 1
          %s324 = smul.addr %s323, 8
          %s325 = scalar_lea.vmem [#allocation7], %s324
          %326 = dma.done %s322, 128
        $region52: #{tpu_custom_call.1} parent=47 // pred_fallthru
          _
      $region48: #{tpu_custom_call.1} parent=5 // pred_fallthru
        _
    $region6: #{tpu_custom_call.1} parent=1 // loop_footer
      %s21 = sadd.s32 1, %s17
    $region7: #{tpu_custom_call.1} parent=1 // loop_footer_branch
      %16 = sbr.rel target = $region3
    $region8: #{tpu_custom_call.1} parent=1 // loop_exit
      _
    %327 = vsyncpa [#allocation3], 1
    %s328 = scalar_lea.sflag [#allocation3], 1
    %329 = vsyncpa %s328, 1
    %330 = vsyncpa [#allocation6], 1
    %s331 = scalar_lea.sflag [#allocation6], 1
    %332 = vsyncpa %s331, 1
    %333 = vsyncpa [#allocation4], 1
    %s334 = scalar_lea.sflag [#allocation4], 1
    %335 = vsyncpa %s334, 1

</llo_original>
